<compile_context>
chip_gen: v7x
topology: tpu7x:2x2x1
jax: 0.10.0
libtpu: 0.0.40
codegen_flags: <defaults>
</compile_context>

<pallas_src>
import functools

import jax
import jax.numpy as jnp
from jax.experimental import pallas as pl
from jax.experimental.pallas import tpu as pltpu


BN_EPS = 1e-5
MM_DTYPE = jnp.bfloat16  # MXU operand dtype; accumulation stays f32


def receiver_kernel(x_ref, w1_ref, gamma_ref, beta_ref, w2_ref, o_ref, *, bn_batch):
    # Cast x to bf16 on the VPU (hidden under the MXU) -- x is DMA'd as f32.
    x = x_ref[...].astype(MM_DTYPE)

    # Linear 1 (bias omitted: it cancels exactly against the BN batch-mean subtraction).
    h = jnp.dot(x, w1_ref[...], preferred_element_type=jnp.float32)  # (G*Bn, D) f32

    rows, d = h.shape
    g = rows // bn_batch
    h3 = h.reshape(g, bn_batch, d)  # layout-preserving split of the row axis

    # BatchNorm1d per independent batch (axis=1), training-mode batch stats, single pass.
    mean = jnp.mean(h3, axis=1, keepdims=True)           # (G, 1, D)
    mean_sq = jnp.mean(h3 * h3, axis=1, keepdims=True)   # (G, 1, D)
    var = jnp.maximum(mean_sq - mean * mean, 0.0)        # clamp rounding-induced negatives
    inv_std = jax.lax.rsqrt(var + BN_EPS)
    scale = gamma_ref[...] * inv_std                     # (1,D)*(G,1,D) -> (G,1,D)
    shift = beta_ref[...] - mean * scale

    # BN + ReLU fused: 1 mul + 1 add + 1 max per element.
    h_relu = jnp.maximum(h3 * scale + shift, 0.0).reshape(rows, d)

    # Linear 2 (no bias): lane-dense padded output store.
    o_ref[...] = jnp.dot(h_relu.astype(MM_DTYPE), w2_ref[...],
                         preferred_element_type=jnp.float32).astype(o_ref.dtype)


def prepare_receiver_params(w1, b1, gamma, beta, w2):
    """One-time parameter prep hoisted out of the forward:
    bf16 cast of both weights and lane-dense (multiple-of-128) padding of w2.
    b1 is accepted for nn.Linear API parity but intentionally dropped -- training-mode
    BatchNorm cancels a per-feature constant bias exactly in the forward output."""
    del b1
    d = w1.shape[0]
    o = w2.shape[1]
    o_pad = ((o + 127) // 128) * 128
    if o_pad != o:
        w2 = jnp.pad(w2, ((0, 0), (0, o_pad - o)))
    return (w1.astype(MM_DTYPE),
            gamma.reshape(1, d).astype(jnp.float32),
            beta.reshape(1, d).astype(jnp.float32),
            w2.astype(MM_DTYPE))


def receiver_forward(x, w1_mm, gamma, beta, w2_mm, *,
                     bn_batch=None, batches_per_step=1,
                     out_dtype=jnp.float32, vmem_limit_bytes=None):
    """Fused Receiver forward.

    x: (TOTAL_B, D) float32. Every consecutive `bn_batch` rows is one independent
    Receiver call (BatchNorm statistics are computed per bn_batch group).
    `batches_per_step` independent batches are packed into one grid step so the first
    matmul runs at M = batches_per_step * bn_batch.
    Returns the lane-padded (TOTAL_B, O_pad) slab; slice [:, :O] lazily in the consumer.
    """
    tb, d = x.shape
    o_pad = w2_mm.shape[1]
    if bn_batch is None:
        bn_batch = tb
    rows_per_step = bn_batch * batches_per_step
    assert tb % bn_batch == 0, "TOTAL_B must be a multiple of bn_batch"
    assert tb % rows_per_step == 0, "TOTAL_B must be a multiple of bn_batch*batches_per_step"
    n_steps = tb // rows_per_step

    cost = pl.CostEstimate(
        flops=2 * tb * d * d + 2 * tb * d * o_pad,
        transcendentals=(tb // bn_batch) * d,  # rsqrt per feature per BN group
        bytes_accessed=(x.size * 4                      # x read as f32
                        + (w1_mm.size + w2_mm.size) * 2  # bf16 weights, resident
                        + 2 * d * 4                      # gamma/beta
                        + tb * o_pad * jnp.dtype(out_dtype).itemsize),
    )

    kernel = functools.partial(receiver_kernel, bn_batch=bn_batch)

    return pl.pallas_call(
        kernel,
        out_shape=jax.ShapeDtypeStruct((tb, o_pad), out_dtype),
        grid=(n_steps,),
        in_specs=[
            pl.BlockSpec((rows_per_step, d), lambda i: (i, 0)),  # x: one slab per step
            pl.BlockSpec((d, d), lambda i: (0, 0)),              # w1: VMEM-resident
            pl.BlockSpec((1, d), lambda i: (0, 0)),              # gamma
            pl.BlockSpec((1, d), lambda i: (0, 0)),              # beta
            pl.BlockSpec((d, o_pad), lambda i: (0, 0)),          # w2: VMEM-resident
        ],
        out_specs=pl.BlockSpec((rows_per_step, o_pad), lambda i: (i, 0)),
        compiler_params=pltpu.CompilerParams(
            dimension_semantics=("parallel",),
            vmem_limit_bytes=vmem_limit_bytes),
        cost_estimate=cost,
    )(x, w1_mm, gamma, beta, w2_mm)


def reference_forward(x, w1, b1, gamma, beta, w2):
    # Pure-JAX reference following PyTorch semantics (bias included, two-pass variance,
    # unfolded BN affine) at the same bf16 matmul-operand precision (f32 accumulation).
    mm = MM_DTYPE
    h = jnp.dot(x.astype(mm), w1.astype(mm),
                preferred_element_type=jnp.float32) + b1.reshape(1, -1)
    mean = h.mean(axis=0, keepdims=True)
    var = ((h - mean) ** 2).mean(axis=0, keepdims=True)
    h = (h - mean) * jax.lax.rsqrt(var + BN_EPS) * gamma.reshape(1, -1) + beta.reshape(1, -1)
    h = jnp.maximum(h, 0.0)
    return jnp.dot(h.astype(mm), w2.astype(mm), preferred_element_type=jnp.float32)


if __name__ == "__main__":
    N_BATCHES = 4   # independent Receiver forwards fused into one pallas_call
    B = 128         # per-forward batch (BN statistics group)
    D = 128         # visual_features_dim
    O = 64          # output_dim (padded to 128 lanes once, in prepare_receiver_params)

    key = jax.random.PRNGKey(0)
    kx, kw1, kb1, kw2 = jax.random.split(key, 4)

    x = jax.random.normal(kx, (N_BATCHES * B, D), dtype=jnp.float32)
    # Deterministic synthetic parameter init (not a checkpoint load).
    w1 = jax.random.normal(kw1, (D, D), dtype=jnp.float32) * (1.0 / jnp.sqrt(D))
    b1 = jax.random.normal(kb1, (D,), dtype=jnp.float32) * 0.01
    gamma = jnp.ones((D,), dtype=jnp.float32)   # BatchNorm1d weight
    beta = jnp.zeros((D,), dtype=jnp.float32)   # BatchNorm1d bias
    w2 = jax.random.normal(kw2, (D, O), dtype=jnp.float32) * (1.0 / jnp.sqrt(D))

    # One-time parameter prep (bf16 cast + lane padding) hoisted out of the forward.
    w1_mm, gamma_p, beta_p, w2_mm = prepare_receiver_params(w1, b1, gamma, beta, w2)

    # Fused path: 2 independent 128-row batches per grid step (M=256 matmul, grid of 2),
    # per-batch BN statistics stay exact.
    out_pad = receiver_forward(x, w1_mm, gamma_p, beta_p, w2_mm,
                               bn_batch=B, batches_per_step=2)
    jax.block_until_ready(out_pad)
    assert out_pad.shape == (N_BATCHES * B, ((O + 127) // 128) * 128)
    out = out_pad[:, :O]  # consumer-side slice of the lane padding

    ref = jnp.concatenate(
        [reference_forward(x[i * B:(i + 1) * B], w1, b1, gamma, beta, w2)
         for i in range(N_BATCHES)], axis=0)
    assert jnp.allclose(out, ref, atol=3e-3, rtol=3e-3), float(jnp.max(jnp.abs(out - ref)))

    # Single-call path (grid of 1): exact module semantics over one whole batch.
    out1 = receiver_forward(x[:B], w1_mm, gamma_p, beta_p, w2_mm)[:, :O]
    jax.block_until_ready(out1)
    ref1 = reference_forward(x[:B], w1, b1, gamma, beta, w2)
    assert jnp.allclose(out1, ref1, atol=3e-3, rtol=3e-3)

    # TODO(synk): BatchNorm1d running_mean/running_var momentum updates are a training-time
    # side effect that does not affect this forward's output; not emitted here.

    print("KERNEL_OK")
</pallas_src>

<mosaic_0001>
module attributes {stable_mosaic.version = 11 : i64} {
  func.func @receiver_kernel(%arg0: i32, %arg1: memref<256x128xf32, #tpu.memory_space<vmem>>, %arg2: memref<128x128xbf16, #tpu.memory_space<vmem>>, %arg3: memref<1x128xf32, #tpu.memory_space<vmem>>, %arg4: memref<1x128xf32, #tpu.memory_space<vmem>>, %arg5: memref<128x128xbf16, #tpu.memory_space<vmem>>, %arg6: memref<256x128xf32, #tpu.memory_space<vmem>>) attributes {dimension_semantics = [#tpu.dimension_semantics<parallel>], iteration_bounds = array<i64: 2>, scalar_prefetch = 0 : i64, scratch_operands = 0 : i64, tpu.core_type = #tpu.core_type<tc>, window_params = [{transform_indices = @transform_0, window_bounds = array<i64: 256, 128>}, {pipeline_mode = #tpu.pipeline_mode<synchronous>, transform_indices = @transform_1, window_bounds = array<i64: 128, 128>}, {pipeline_mode = #tpu.pipeline_mode<synchronous>, transform_indices = @transform_2, window_bounds = array<i64: 1, 128>}, {pipeline_mode = #tpu.pipeline_mode<synchronous>, transform_indices = @transform_3, window_bounds = array<i64: 1, 128>}, {pipeline_mode = #tpu.pipeline_mode<synchronous>, transform_indices = @transform_4, window_bounds = array<i64: 128, 128>}, {transform_indices = @transform_5, window_bounds = array<i64: 256, 128>}]} {
    %c0 = arith.constant 0 : index
    %c0_0 = arith.constant 0 : index
    %0 = vector.load %arg1[%c0, %c0_0] : memref<256x128xf32, #tpu.memory_space<vmem>>, vector<256x128xf32>
    %1 = arith.truncf %0 : vector<256x128xf32> to vector<256x128xbf16>
    %c0_1 = arith.constant 0 : index
    %c0_2 = arith.constant 0 : index
    %2 = vector.load %arg2[%c0_1, %c0_2] : memref<128x128xbf16, #tpu.memory_space<vmem>>, vector<128x128xbf16>
    %cst = arith.constant dense<0.000000e+00> : vector<256x128xf32>
    %3 = tpu.matmul %1, %2, %cst {dimension_numbers = #tpu.dot_dimension_numbers<[1], [0], [0], [1], [0, 0, 1, 1], [], []>} : vector<256x128xbf16>, vector<128x128xbf16>, vector<256x128xf32> -> vector<256x128xf32>
    %4 = vector.shape_cast %3 : vector<256x128xf32> to vector<2x128x128xf32>
    %cst_3 = arith.constant dense<0.000000e+00> : vector<2x128xf32>
    %5 = vector.multi_reduction <add>, %4, %cst_3 [1] : vector<2x128x128xf32> to vector<2x128xf32>
    %6 = vector.shape_cast %5 : vector<2x128xf32> to vector<2x1x128xf32>
    %cst_4 = arith.constant 1.280000e+02 : f32
    %7 = vector.broadcast %cst_4 : f32 to vector<2x1x128xf32>
    %8 = arith.divf %6, %7 : vector<2x1x128xf32>
    %9 = arith.mulf %4, %4 : vector<2x128x128xf32>
    %cst_5 = arith.constant dense<0.000000e+00> : vector<2x128xf32>
    %10 = vector.multi_reduction <add>, %9, %cst_5 [1] : vector<2x128x128xf32> to vector<2x128xf32>
    %11 = vector.shape_cast %10 : vector<2x128xf32> to vector<2x1x128xf32>
    %cst_6 = arith.constant 1.280000e+02 : f32
    %12 = vector.broadcast %cst_6 : f32 to vector<2x1x128xf32>
    %13 = arith.divf %11, %12 : vector<2x1x128xf32>
    %14 = arith.mulf %8, %8 : vector<2x1x128xf32>
    %15 = arith.subf %13, %14 : vector<2x1x128xf32>
    %cst_7 = arith.constant 0.000000e+00 : f32
    %16 = vector.broadcast %cst_7 : f32 to vector<2x1x128xf32>
    %17 = arith.maximumf %15, %16 : vector<2x1x128xf32>
    %cst_8 = arith.constant 9.99999974E-6 : f32
    %18 = vector.broadcast %cst_8 : f32 to vector<2x1x128xf32>
    %19 = arith.addf %17, %18 : vector<2x1x128xf32>
    %20 = math.rsqrt %19 : vector<2x1x128xf32>
    %c0_9 = arith.constant 0 : index
    %c0_10 = arith.constant 0 : index
    %21 = vector.load %arg3[%c0_9, %c0_10] : memref<1x128xf32, #tpu.memory_space<vmem>>, vector<1x128xf32>
    %22 = vector.shape_cast %21 : vector<1x128xf32> to vector<1x1x128xf32>
    %23 = vector.broadcast %22 : vector<1x1x128xf32> to vector<2x1x128xf32>
    %24 = arith.mulf %23, %20 : vector<2x1x128xf32>
    %c0_11 = arith.constant 0 : index
    %c0_12 = arith.constant 0 : index
    %25 = vector.load %arg4[%c0_11, %c0_12] : memref<1x128xf32, #tpu.memory_space<vmem>>, vector<1x128xf32>
    %26 = arith.mulf %8, %24 : vector<2x1x128xf32>
    %27 = vector.shape_cast %25 : vector<1x128xf32> to vector<1x1x128xf32>
    %28 = vector.broadcast %27 : vector<1x1x128xf32> to vector<2x1x128xf32>
    %29 = arith.subf %28, %26 : vector<2x1x128xf32>
    %30 = vector.broadcast %24 : vector<2x1x128xf32> to vector<2x128x128xf32>
    %31 = arith.mulf %4, %30 : vector<2x128x128xf32>
    %32 = vector.broadcast %29 : vector<2x1x128xf32> to vector<2x128x128xf32>
    %33 = arith.addf %31, %32 : vector<2x128x128xf32>
    %cst_13 = arith.constant 0.000000e+00 : f32
    %34 = vector.broadcast %cst_13 : f32 to vector<2x128x128xf32>
    %35 = arith.maximumf %33, %34 : vector<2x128x128xf32>
    %36 = vector.shape_cast %35 : vector<2x128x128xf32> to vector<256x128xf32>
    %37 = arith.truncf %36 : vector<256x128xf32> to vector<256x128xbf16>
    %c0_14 = arith.constant 0 : index
    %c0_15 = arith.constant 0 : index
    %38 = vector.load %arg5[%c0_14, %c0_15] : memref<128x128xbf16, #tpu.memory_space<vmem>>, vector<128x128xbf16>
    %cst_16 = arith.constant dense<0.000000e+00> : vector<256x128xf32>
    %39 = tpu.matmul %37, %38, %cst_16 {dimension_numbers = #tpu.dot_dimension_numbers<[1], [0], [0], [1], [0, 0, 1, 1], [], []>} : vector<256x128xbf16>, vector<128x128xbf16>, vector<256x128xf32> -> vector<256x128xf32>
    %c0_17 = arith.constant 0 : index
    %c0_18 = arith.constant 0 : index
    %40 = vector.load %arg6[%c0_17, %c0_18] : memref<256x128xf32, #tpu.memory_space<vmem>>, vector<256x128xf32>
    tpu.vector_store %arg6[%c0_17, %c0_18], %39 {strides = array<i32>} : memref<256x128xf32, #tpu.memory_space<vmem>>, vector<256x128xf32>,
    return
  }
  func.func @transform_0(%arg0: i32) -> (i32, i32) {
    %c0_i32 = arith.constant 0 : i32
    %c0_i32_0 = arith.constant 0 : i32
    return %arg0, %c0_i32 : i32, i32
  }
  func.func @transform_1(%arg0: i32) -> (i32, i32) {
    %c0_i32 = arith.constant 0 : i32
    %c0_i32_0 = arith.constant 0 : i32
    %c0_i32_1 = arith.constant 0 : i32
    return %c0_i32, %c0_i32_0 : i32, i32
  }
  func.func @transform_2(%arg0: i32) -> (i32, i32) {
    %c0_i32 = arith.constant 0 : i32
    %c0_i32_0 = arith.constant 0 : i32
    %c0_i32_1 = arith.constant 0 : i32
    return %c0_i32, %c0_i32_0 : i32, i32
  }
  func.func @transform_3(%arg0: i32) -> (i32, i32) {
    %c0_i32 = arith.constant 0 : i32
    %c0_i32_0 = arith.constant 0 : i32
    %c0_i32_1 = arith.constant 0 : i32
    return %c0_i32, %c0_i32_0 : i32, i32
  }
  func.func @transform_4(%arg0: i32) -> (i32, i32) {
    %c0_i32 = arith.constant 0 : i32
    %c0_i32_0 = arith.constant 0 : i32
    %c0_i32_1 = arith.constant 0 : i32
    return %c0_i32, %c0_i32_0 : i32, i32
  }
  func.func @transform_5(%arg0: i32) -> (i32, i32) {
    %c0_i32 = arith.constant 0 : i32
    %c0_i32_0 = arith.constant 0 : i32
    return %arg0, %c0_i32 : i32, i32
  }
}

</mosaic_0001>

<llo_original>
// kernel: tpu_custom_call.1
$region0: #{tpu_custom_call.1}
  #allocation0 [shape = 'u32[]', space=smem, size = 0x4, offset = 0x4, fixed_abs, tag = 'smem constant byte address 0x4 - core index']
  #allocation1 [shape = 'u32[144,128]{1,0:T(1,128)}', space=vmem, size = 0x12000, scoped, tag = 'internal scratch']
  %s0 = inlined_call_operand.hbm [shape: f32[512,128], index: 0, kind: input, shape index: {}]
  %s1 = inlined_call_operand.hbm [shape: bf16[128,128], index: 1, kind: input, shape index: {}]
  %s2 = inlined_call_operand.vmem [shape: f32[1,128], index: 2, kind: input, shape index: {}]
  %s3 = inlined_call_operand.vmem [shape: f32[1,128], index: 3, kind: input, shape index: {}]
  %s4 = inlined_call_operand.hbm [shape: bf16[128,128], index: 4, kind: input, shape index: {}]
  %s5 = inlined_call_operand.hbm [shape: f32[512,128], index: 5, kind: output, shape index: {}]
  %s6 = sld [smem:[#allocation0]]
  $region65: #{tpu_custom_call.1} parent=0
    _
  %s8 = ssub.s32 1, %s6
  %s9 = scalar_select 0, %s8, %s6
  $region1: #{tpu_custom_call.1} parent=0
    #allocation2 [shape = 'u8[262144]{0}', space=vmem, size = 0x40000, scoped, tag = 'input window, operand 0']
    #allocation3 [shape = 's32[2]{0}', space=sflag, size = 0x8, scoped, tag = 'scoped memory for tpu_custom_call.1']
    #allocation4 [shape = 's32[2]{0}', space=sflag, size = 0x8, scoped, tag = 'scoped memory for tpu_custom_call.1']
    #allocation5 [shape = 'u8[32768]{0}', space=vmem, size = 0x8000, scoped, tag = 'input window, operand 1, single buffered']
    #allocation6 [shape = 's32[1]{0}', space=sflag, size = 0x4, scoped, tag = 'scoped memory for tpu_custom_call.1']
    #allocation7 [shape = 'u8[32768]{0}', space=vmem, size = 0x8000, scoped, tag = 'input window, operand 4, single buffered']
    #allocation8 [shape = 'u8[262144]{0}', space=vmem, size = 0x40000, scoped, tag = 'output window, operand 0']
    %10 = vsyncpa [#allocation3], 0
    %s11 = scalar_lea.sflag [#allocation3], 1
    %12 = vsyncpa %s11, 0
    %13 = vsyncpa [#allocation6], 0
    %14 = vsyncpa [#allocation4], 0
    %s15 = scalar_lea.sflag [#allocation4], 1
    %16 = vsyncpa %s15, 0
    loop: start=0, step=1, limit=4
    $region2: #{tpu_custom_call.1} parent=1 // loop_pre_header
      _
    $region3: #{tpu_custom_call.1} parent=1 // loop_header
      %s18 = sphi 0, %s22
      %p19 = scmp.ge.s32.totalorder %s18, 4
      %s28 = sphi 0, %s30
      %s31 = sphi 0, %s28
      %s32 = sphi 0, %s31
      %s48 = sphi 0, %s32
      %s52 = sphi 0, %s52
      %s54 = sphi 0, %s52
      %s55 = sphi 0, %s54
      %s69 = sphi 0, %s55
      %s73 = sphi 0, %s73
      %s75 = sphi 0, %s73
      %s76 = sphi 0, %s75
      %s90 = sphi 0, %s76
      %s94 = sphi 0, %s94
      %s96 = sphi 0, %s94
      %s97 = sphi 0, %s96
      %s111 = sphi 0, %s97
      %s115 = sphi 0, %s115
      %s117 = sphi 0, %s115
      %s118 = sphi 0, %s117
      %s132 = sphi 0, %s118
      %s138 = sphi 0, %s140
      %s141 = sphi 0, %s138
      %s142 = sphi 0, %s141
      %s158 = sphi 0, %s142
    $region4: #{tpu_custom_call.1} parent=1 // loop_header_branch
      %21 = sbr.rel (%p19) target = $region8
    $region5: #{tpu_custom_call.1} parent=1 // loop_body
      %s23 = ssub.s32 %s18, 1
      %s24 = ssub.s32 %s18, 2
      %s25 = sadd.s32 %s18, 1
      %s26 = ssub.s32 %s18, %s25
      %p27 = scmp.eq.s32.totalorder %s26, 0
      %s29 = sadd.s32 %s28, 1
      %s30 = scalar_select %p27, %s28, %s29
      %p33 = pneg %p27
      %p34 = scmp.eq.s32.totalorder %s18, 1
      %p35 = por %p33, %p34
      %p36 = scmp.ne.s32.totalorder %s28, %s31
      %p37 = scmp.eq.s32.totalorder %s18, 0
      %p38 = por %p36, %p37
      %p39 = scmp.ne.s32.totalorder %s28, %s31
      %p40 = scmp.eq.s32.totalorder %s23, 1
      %p41 = por %p39, %p40
      %p42 = scmp.ne.s32.totalorder %s31, %s32
      %p43 = scmp.eq.s32.totalorder %s23, 0
      %p44 = por %p42, %p43
      %p45 = scmp.ne.s32.totalorder %s31, %s32
      %p46 = scmp.eq.s32.totalorder %s24, 1
      %p47 = por %p45, %p46
      %p49 = scmp.ne.s32.totalorder %s32, %s48
      %p50 = scmp.eq.s32.totalorder %s24, 0
      %p51 = por %p49, %p50
      %s53 = sadd.s32 %s52, 1
      %p56 = scmp.eq.s32.totalorder %s18, 1
      %p57 = scmp.ne.s32.totalorder %s52, %s54
      %p58 = scmp.eq.s32.totalorder %s18, 0
      %p59 = por %p57, %p58
      %p60 = scmp.ne.s32.totalorder %s52, %s54
      %p61 = scmp.eq.s32.totalorder %s23, 1
      %p62 = por %p60, %p61
      %p63 = scmp.ne.s32.totalorder %s54, %s55
      %p64 = scmp.eq.s32.totalorder %s23, 0
      %p65 = por %p63, %p64
      %p66 = scmp.ne.s32.totalorder %s54, %s55
      %p67 = scmp.eq.s32.totalorder %s24, 1
      %p68 = por %p66, %p67
      %p70 = scmp.ne.s32.totalorder %s55, %s69
      %p71 = scmp.eq.s32.totalorder %s24, 0
      %p72 = por %p70, %p71
      %s74 = sadd.s32 %s73, 1
      %p77 = scmp.eq.s32.totalorder %s18, 1
      %p78 = scmp.ne.s32.totalorder %s73, %s75
      %p79 = scmp.eq.s32.totalorder %s18, 0
      %p80 = por %p78, %p79
      %p81 = scmp.ne.s32.totalorder %s73, %s75
      %p82 = scmp.eq.s32.totalorder %s23, 1
      %p83 = por %p81, %p82
      %p84 = scmp.ne.s32.totalorder %s75, %s76
      %p85 = scmp.eq.s32.totalorder %s23, 0
      %p86 = por %p84, %p85
      %p87 = scmp.ne.s32.totalorder %s75, %s76
      %p88 = scmp.eq.s32.totalorder %s24, 1
      %p89 = por %p87, %p88
      %p91 = scmp.ne.s32.totalorder %s76, %s90
      %p92 = scmp.eq.s32.totalorder %s24, 0
      %p93 = por %p91, %p92
      %s95 = sadd.s32 %s94, 1
      %p98 = scmp.eq.s32.totalorder %s18, 1
      %p99 = scmp.ne.s32.totalorder %s94, %s96
      %p100 = scmp.eq.s32.totalorder %s18, 0
      %p101 = por %p99, %p100
      %p102 = scmp.ne.s32.totalorder %s94, %s96
      %p103 = scmp.eq.s32.totalorder %s23, 1
      %p104 = por %p102, %p103
      %p105 = scmp.ne.s32.totalorder %s96, %s97
      %p106 = scmp.eq.s32.totalorder %s23, 0
      %p107 = por %p105, %p106
      %p108 = scmp.ne.s32.totalorder %s96, %s97
      %p109 = scmp.eq.s32.totalorder %s24, 1
      %p110 = por %p108, %p109
      %p112 = scmp.ne.s32.totalorder %s97, %s111
      %p113 = scmp.eq.s32.totalorder %s24, 0
      %p114 = por %p112, %p113
      %s116 = sadd.s32 %s115, 1
      %p119 = scmp.eq.s32.totalorder %s18, 1
      %p120 = scmp.ne.s32.totalorder %s115, %s117
      %p121 = scmp.eq.s32.totalorder %s18, 0
      %p122 = por %p120, %p121
      %p123 = scmp.ne.s32.totalorder %s115, %s117
      %p124 = scmp.eq.s32.totalorder %s23, 1
      %p125 = por %p123, %p124
      %p126 = scmp.ne.s32.totalorder %s117, %s118
      %p127 = scmp.eq.s32.totalorder %s23, 0
      %p128 = por %p126, %p127
      %p129 = scmp.ne.s32.totalorder %s117, %s118
      %p130 = scmp.eq.s32.totalorder %s24, 1
      %p131 = por %p129, %p130
      %p133 = scmp.ne.s32.totalorder %s118, %s132
      %p134 = scmp.eq.s32.totalorder %s24, 0
      %p135 = por %p133, %p134
      %s136 = ssub.s32 %s18, %s25
      %p137 = scmp.eq.s32.totalorder %s136, 0
      %s139 = sadd.s32 %s138, 1
      %s140 = scalar_select %p137, %s138, %s139
      %p143 = pneg %p137
      %p144 = scmp.eq.s32.totalorder %s18, 1
      %p145 = por %p143, %p144
      %p146 = scmp.ne.s32.totalorder %s138, %s141
      %p147 = scmp.eq.s32.totalorder %s18, 0
      %p148 = por %p146, %p147
      %p149 = scmp.ne.s32.totalorder %s138, %s141
      %p150 = scmp.eq.s32.totalorder %s23, 1
      %p151 = por %p149, %p150
      %p152 = scmp.ne.s32.totalorder %s141, %s142
      %p153 = scmp.eq.s32.totalorder %s23, 0
      %p154 = por %p152, %p153
      %p155 = scmp.ne.s32.totalorder %s141, %s142
      %p156 = scmp.eq.s32.totalorder %s24, 1
      %p157 = por %p155, %p156
      %p159 = scmp.ne.s32.totalorder %s142, %s158
      %p160 = scmp.eq.s32.totalorder %s24, 0
      %p161 = por %p159, %p160
      %p162 = scmp.le.s32.totalorder 1, %s18
      %p163 = scmp.lt.s32.totalorder %s18, 3
      %p164 = pnand %p162, %p163
      %p165 = pneg %p164
      // Predicated region
      $region9: #{tpu_custom_call.1} parent=5 // pred_check
        _
      $region10: #{tpu_custom_call.1} parent=5 // pred_check_branch
        %167 = sbr.rel (%p164) target = $region12
      $region11: #{tpu_custom_call.1} parent=5 // pred_region
        %s168 = ssub.s32 %s18, 1
        // Predicated region
        $region13: #{tpu_custom_call.1} parent=11 // pred_check
          %p169 = pneg %p65
        $region14: #{tpu_custom_call.1} parent=11 // pred_check_branch
          %171 = sbr.rel (%p169) target = $region16
        $region15: #{tpu_custom_call.1} parent=11 // pred_region
          %s173 = ssub.s32 1024, 1024
          %174 = vsyncadd [#allocation6], %s173
          %s175 = sshll.u32 [#allocation5], 4
          %s176 = int_to_ptr.vmem [resolvable:$true] %s175
          %181 = dma.hbm_to_vmem [thread:$0]  %s1, 1024, %s176, [#allocation6], 64, 64, 4
        $region16: #{tpu_custom_call.1} parent=11 // pred_fallthru
          _
        // Predicated region
        $region17: #{tpu_custom_call.1} parent=11 // pred_check
          %p182 = pneg %p86
        $region18: #{tpu_custom_call.1} parent=11 // pred_check_branch
          %184 = sbr.rel (%p182) target = $region20
        $region19: #{tpu_custom_call.1} parent=11 // pred_region
          _
        $region20: #{tpu_custom_call.1} parent=11 // pred_fallthru
          _
        // Predicated region
        $region21: #{tpu_custom_call.1} parent=11 // pred_check
          %p185 = pneg %p107
        $region22: #{tpu_custom_call.1} parent=11 // pred_check_branch
          %187 = sbr.rel (%p185) target = $region24
        $region23: #{tpu_custom_call.1} parent=11 // pred_region
          _
        $region24: #{tpu_custom_call.1} parent=11 // pred_fallthru
          _
        // Predicated region
        $region25: #{tpu_custom_call.1} parent=11 // pred_check
          %p188 = pneg %p128
        $region26: #{tpu_custom_call.1} parent=11 // pred_check_branch
          %190 = sbr.rel (%p188) target = $region28
        $region27: #{tpu_custom_call.1} parent=11 // pred_region
          %s192 = ssub.s32 1024, 1024
          %193 = vsyncadd [#allocation6], %s192
          %s194 = sshll.u32 [#allocation7], 4
          %s195 = int_to_ptr.vmem [resolvable:$true] %s194
          %200 = dma.hbm_to_vmem [thread:$0]  %s4, 1024, %s195, [#allocation6], 64, 64, 4
        $region28: #{tpu_custom_call.1} parent=11 // pred_fallthru
          _
      $region12: #{tpu_custom_call.1} parent=5 // pred_fallthru
        _
      %p201 = scmp.lt.s32.totalorder %s18, 2
      // Predicated region
      $region29: #{tpu_custom_call.1} parent=5 // pred_check
        %p202 = pneg %p201
      $region30: #{tpu_custom_call.1} parent=5 // pred_check_branch
        %204 = sbr.rel (%p202) target = $region32
      $region31: #{tpu_custom_call.1} parent=5 // pred_region
        // Predicated region
        $region33: #{tpu_custom_call.1} parent=31 // pred_check
          %p205 = pneg %p38
        $region34: #{tpu_custom_call.1} parent=31 // pred_check_branch
          %207 = sbr.rel (%p205) target = $region36
        $region35: #{tpu_custom_call.1} parent=31 // pred_region
          %s208 = sand.u32 %s28, 1
          %s209 = scalar_lea.sflag [#allocation3], %s208
          %s210 = sand.u32 %s28, 1
          %s211 = smul.addr %s210, 256
          %s212 = scalar_lea.vmem [#allocation2], %s211
          %s213 = smul.u32 32, %s18
          %s215 = ssub.s32 4096, 4096
          %216 = vsyncadd %s209, %s215
          %s217 = smul.addr %s213, 128
          %s218 = scalar_lea.hbm %s0, %s217
          %s219 = sshll.u32 %s212, 4
          %s220 = int_to_ptr.vmem [resolvable:$true] %s219
          %225 = dma.hbm_to_vmem [thread:$0]  %s218, 4096, %s220, %s209, 128, 128, 8
        $region36: #{tpu_custom_call.1} parent=31 // pred_fallthru
          _
      $region32: #{tpu_custom_call.1} parent=5 // pred_fallthru
        _
      %p226 = scmp.le.s32.totalorder 1, %s18
      %p227 = scmp.lt.s32.totalorder %s18, 3
      %p228 = pnand %p226, %p227
      %p229 = pneg %p228
      // Predicated region
      $region37: #{tpu_custom_call.1} parent=5 // pred_check
        _
      $region38: #{tpu_custom_call.1} parent=5 // pred_check_branch
        %231 = sbr.rel (%p228) target = $region40
      $region39: #{tpu_custom_call.1} parent=5 // pred_region
        %s232 = ssub.s32 %s18, 1
        %s233 = sand.u32 %s31, 1
        %s234 = scalar_lea.sflag [#allocation3], %s233
        %s235 = sand.u32 %s31, 1
        %s236 = smul.addr %s235, 256
        %s237 = scalar_lea.vmem [#allocation2], %s236
        // Predicated region
        $region41: #{tpu_custom_call.1} parent=39 // pred_check
          %p238 = pneg %p44
        $region42: #{tpu_custom_call.1} parent=39 // pred_check_branch
          %240 = sbr.rel (%p238) target = $region44
        $region43: #{tpu_custom_call.1} parent=39 // pred_region
          %241 = dma.done %s234, 4096
        $region44: #{tpu_custom_call.1} parent=39 // pred_fallthru
          _
        // Predicated region
        $region45: #{tpu_custom_call.1} parent=39 // pred_check
          %p242 = pneg %p65
        $region46: #{tpu_custom_call.1} parent=39 // pred_check_branch
          %244 = sbr.rel (%p242) target = $region48
        $region47: #{tpu_custom_call.1} parent=39 // pred_region
          %245 = dma.done [#allocation6], 1024
        $region48: #{tpu_custom_call.1} parent=39 // pred_fallthru
          _
        // Predicated region
        $region49: #{tpu_custom_call.1} parent=39 // pred_check
          %p246 = pneg %p128
        $region50: #{tpu_custom_call.1} parent=39 // pred_check_branch
          %248 = sbr.rel (%p246) target = $region52
        $region51: #{tpu_custom_call.1} parent=39 // pred_region
          %249 = dma.done [#allocation6], 1024
        $region52: #{tpu_custom_call.1} parent=39 // pred_fallthru
          _
        %s250 = sand.u32 %s31, 1
        %s251 = scalar_lea.sflag [#allocation3], %s250
        %s252 = sand.u32 %s31, 1
        %s253 = smul.addr %s252, 256
        %s254 = scalar_lea.vmem [#allocation2], %s253
        %p255 = pneg %p44
        %p256 = pneg %p41
        %p257 = pneg %p65
        %p258 = pneg %p62
        %p259 = pneg %p86
        %p260 = pneg %p83
        %p261 = pneg %p107
        %p262 = pneg %p104
        %p263 = pneg %p128
        %p264 = pneg %p125
        %p265 = pneg %p154
        %p266 = pneg %p151
        %s267 = sand.u32 %s141, 1
        %s268 = scalar_lea.sflag [#allocation4], %s267
        %s269 = sand.u32 %s141, 1
        %s270 = smul.addr %s269, 256
        %s271 = scalar_lea.vmem [#allocation8], %s270
        %s272 = smul.u32 32, %s23
        %s273 = smul.u32 32, %s23
        %v275 = vld [vmem:[%s237] sm:$0xff]
        %v276 = vld [vmem:[%s237 + $0x8] sm:$0xff]
        %v277 = vld [vmem:[%s237 + $0x10] sm:$0xff]
        %v278 = vld [vmem:[%s237 + $0x18] sm:$0xff]
        %v279 = vld [vmem:[%s237 + $0x20] sm:$0xff]
        %v280 = vld [vmem:[%s237 + $0x28] sm:$0xff]
        %v281 = vld [vmem:[%s237 + $0x30] sm:$0xff]
        %v282 = vld [vmem:[%s237 + $0x38] sm:$0xff]
        %v283 = vld [vmem:[%s237 + $0x40] sm:$0xff]
        %v284 = vld [vmem:[%s237 + $0x48] sm:$0xff]
        %v285 = vld [vmem:[%s237 + $0x50] sm:$0xff]
        %v286 = vld [vmem:[%s237 + $0x58] sm:$0xff]
        %v287 = vld [vmem:[%s237 + $0x60] sm:$0xff]
        %v288 = vld [vmem:[%s237 + $0x68] sm:$0xff]
        %v289 = vld [vmem:[%s237 + $0x70] sm:$0xff]
        %v290 = vld [vmem:[%s237 + $0x78] sm:$0xff]
        %v291 = vld [vmem:[%s237 + $0x80] sm:$0xff]
        %v292 = vld [vmem:[%s237 + $0x88] sm:$0xff]
        %v293 = vld [vmem:[%s237 + $0x90] sm:$0xff]
        %v294 = vld [vmem:[%s237 + $0x98] sm:$0xff]
        %v295 = vld [vmem:[%s237 + $0xa0] sm:$0xff]
        %v296 = vld [vmem:[%s237 + $0xa8] sm:$0xff]
        %v297 = vld [vmem:[%s237 + $0xb0] sm:$0xff]
        %v298 = vld [vmem:[%s237 + $0xb8] sm:$0xff]
        %v299 = vld [vmem:[%s237 + $0xc0] sm:$0xff]
        %v300 = vld [vmem:[%s237 + $0xc8] sm:$0xff]
        %v301 = vld [vmem:[%s237 + $0xd0] sm:$0xff]
        %v302 = vld [vmem:[%s237 + $0xd8] sm:$0xff]
        %v303 = vld [vmem:[%s237 + $0xe0] sm:$0xff]
        %v304 = vld [vmem:[%s237 + $0xe8] sm:$0xff]
        %v305 = vld [vmem:[%s237 + $0xf0] sm:$0xff]
        %v306 = vld [vmem:[%s237 + $0xf8] sm:$0xff]
        %v307 = vpack.c.bf16 %v276, %v275
        %v308 = vpack.c.bf16 %v278, %v277
        %v309 = vpack.c.bf16 %v280, %v279
        %v310 = vpack.c.bf16 %v282, %v281
        %v311 = vpack.c.bf16 %v284, %v283
        %v312 = vpack.c.bf16 %v286, %v285
        %v313 = vpack.c.bf16 %v288, %v287
        %v314 = vpack.c.bf16 %v290, %v289
        %v315 = vpack.c.bf16 %v292, %v291
        %v316 = vpack.c.bf16 %v294, %v293
        %v317 = vpack.c.bf16 %v296, %v295
        %v318 = vpack.c.bf16 %v298, %v297
        %v319 = vpack.c.bf16 %v300, %v299
        %v320 = vpack.c.bf16 %v302, %v301
        %v321 = vpack.c.bf16 %v304, %v303
        %v322 = vpack.c.bf16 %v306, %v305
        %v323 = vld [vmem:[#allocation5] sm:$0xf]
        %v324 = vld [vmem:[#allocation5 + $0x4] sm:$0xf]
        %v325 = vld [vmem:[#allocation5 + $0x8] sm:$0xf]
        %v326 = vld [vmem:[#allocation5 + $0xc] sm:$0xf]
        %v327 = vld [vmem:[#allocation5 + $0x10] sm:$0xf]
        %v328 = vld [vmem:[#allocation5 + $0x14] sm:$0xf]
        %v329 = vld [vmem:[#allocation5 + $0x18] sm:$0xf]
        %v330 = vld [vmem:[#allocation5 + $0x1c] sm:$0xf]
        %v331 = vld [vmem:[#allocation5 + $0x20] sm:$0xf]
        %v332 = vld [vmem:[#allocation5 + $0x24] sm:$0xf]
        %v333 = vld [vmem:[#allocation5 + $0x28] sm:$0xf]
        %v334 = vld [vmem:[#allocation5 + $0x2c] sm:$0xf]
        %v335 = vld [vmem:[#allocation5 + $0x30] sm:$0xf]
        %v336 = vld [vmem:[#allocation5 + $0x34] sm:$0xf]
        %v337 = vld [vmem:[#allocation5 + $0x38] sm:$0xf]
        %v338 = vld [vmem:[#allocation5 + $0x3c] sm:$0xf]
        %v355 = vunpack.c.l.b16 %v323
        %v356 = vunpack.c.l.b16 %v324
        %v357 = vunpack.c.l.b16 %v325
        %v358 = vunpack.c.l.b16 %v326
        %v359 = vunpack.c.l.b16 %v327
        %v360 = vunpack.c.l.b16 %v328
        %v361 = vunpack.c.l.b16 %v329
        %v362 = vunpack.c.l.b16 %v330
        %v363 = vunpack.c.l.b16 %v331
        %v364 = vunpack.c.l.b16 %v332
        %v365 = vunpack.c.l.b16 %v333
        %v366 = vunpack.c.l.b16 %v334
        %v367 = vunpack.c.l.b16 %v335
        %v368 = vunpack.c.l.b16 %v336
        %v369 = vunpack.c.l.b16 %v337
        %v370 = vunpack.c.l.b16 %v338
        %v371 = vpack.c.b16 %v356, %v355
        %v372 = vpack.c.b16 %v358, %v357
        %v373 = vpack.c.b16 %v360, %v359
        %v374 = vpack.c.b16 %v362, %v361
        %v375 = vpack.c.b16 %v364, %v363
        %v376 = vpack.c.b16 %v366, %v365
        %v377 = vpack.c.b16 %v368, %v367
        %v378 = vpack.c.b16 %v370, %v369
        %387 = vmatprep.subr.bf16.mxu0 0
        %388 = vmatpush1.bf16.msra.mxu0 %v371
        %389 = vmatprep.subr.bf16.mxu0 0
        %390 = vmatpush1.bf16.msra.mxu0 %v372
        %391 = vmatprep.subr.bf16.mxu0 0
        %392 = vmatpush1.bf16.msra.mxu0 %v373
        %393 = vmatprep.subr.bf16.mxu0 0
        %394 = vmatpush1.bf16.msra.mxu0 %v374
        %395 = vmatprep.subr.bf16.mxu0 0
        %396 = vmatpush1.bf16.msra.mxu0 %v375
        %397 = vmatprep.subr.bf16.mxu0 0
        %398 = vmatpush1.bf16.msra.mxu0 %v376
        %399 = vmatprep.subr.bf16.mxu0 0
        %400 = vmatpush1.bf16.msra.mxu0 %v377
        %401 = vmatprep.subr.bf16.mxu0 0
        %402 = vmatpush1.bf16.msra.mxu0 %v378
        %403 = vmatprep.subr.bf16.mxu0 0
        %404 = vmatpush1.bf16.msra.mxu0 0
        %405 = vmatprep.subr.bf16.mxu0 0
        %406 = vmatpush1.bf16.msra.mxu0 0
        %407 = vmatprep.subr.bf16.mxu0 0
        %408 = vmatpush1.bf16.msra.mxu0 0
        %409 = vmatprep.subr.bf16.mxu0 0
        %410 = vmatpush1.bf16.msra.mxu0 0
        %411 = vmatprep.subr.bf16.mxu0 0
        %412 = vmatpush1.bf16.msra.mxu0 0
        %413 = vmatprep.subr.bf16.mxu0 0
        %414 = vmatpush1.bf16.msra.mxu0 0
        %415 = vmatprep.subr.bf16.mxu0 0
        %416 = vmatpush1.bf16.msra.mxu0 0
        %417 = vmatprep.subr.bf16.mxu0 0
        %418 = vmatpush1.bf16.msra.mxu0 0
        %419 = vmatprep.mubr.bf16.mxu0 0
        %420 = vmatmul.mubr.bf16.gmra.mrb[0].mxu0 %v307
        %v421 = vpop.f32.mrb[0].mxu0
        %v422 = vadd.f32 0.0, %v421
        %v423 = vpop.f32.mrb[0].mxu0
        %v424 = vpop.f32.mrb[0].mxu0
        %v425 = vadd.f32 0.0, %v424
        %v426 = vpop.f32.mrb[0].mxu0
        %427 = vmatprep.mubr.bf16.mxu0 0
        %428 = vmatmul.mubr.bf16.gmra.mrb[0].mxu0 %v308
        %v429 = vpop.f32.mrb[0].mxu0
        %v430 = vadd.f32 0.0, %v429
        %v431 = vpop.f32.mrb[0].mxu0
        %v432 = vpop.f32.mrb[0].mxu0
        %v433 = vadd.f32 0.0, %v432
        %v434 = vpop.f32.mrb[0].mxu0
        %435 = vmatprep.mubr.bf16.mxu0 0
        %436 = vmatmul.mubr.bf16.gmra.mrb[0].mxu0 %v309
        %v437 = vpop.f32.mrb[0].mxu0
        %v438 = vadd.f32 0.0, %v437
        %v439 = vpop.f32.mrb[0].mxu0
        %v440 = vpop.f32.mrb[0].mxu0
        %v441 = vadd.f32 0.0, %v440
        %v442 = vpop.f32.mrb[0].mxu0
        %443 = vmatprep.mubr.bf16.mxu0 0
        %444 = vmatmul.mubr.bf16.gmra.mrb[0].mxu0 %v310
        %v445 = vpop.f32.mrb[0].mxu0
        %v446 = vadd.f32 0.0, %v445
        %v447 = vpop.f32.mrb[0].mxu0
        %v448 = vpop.f32.mrb[0].mxu0
        %v449 = vadd.f32 0.0, %v448
        %v450 = vpop.f32.mrb[0].mxu0
        %451 = vmatprep.mubr.bf16.mxu0 0
        %452 = vmatmul.mubr.bf16.gmra.mrb[0].mxu0 %v311
        %v453 = vpop.f32.mrb[0].mxu0
        %v454 = vadd.f32 0.0, %v453
        %v455 = vpop.f32.mrb[0].mxu0
        %v456 = vpop.f32.mrb[0].mxu0
        %v457 = vadd.f32 0.0, %v456
        %v458 = vpop.f32.mrb[0].mxu0
        %459 = vmatprep.mubr.bf16.mxu0 0
        %460 = vmatmul.mubr.bf16.gmra.mrb[0].mxu0 %v312
        %v461 = vpop.f32.mrb[0].mxu0
        %v462 = vadd.f32 0.0, %v461
        %v463 = vpop.f32.mrb[0].mxu0
        %v464 = vpop.f32.mrb[0].mxu0
        %v465 = vadd.f32 0.0, %v464
        %v466 = vpop.f32.mrb[0].mxu0
        %467 = vmatprep.mubr.bf16.mxu0 0
        %468 = vmatmul.mubr.bf16.gmra.mrb[0].mxu0 %v313
        %v469 = vpop.f32.mrb[0].mxu0
        %v470 = vadd.f32 0.0, %v469
        %v471 = vpop.f32.mrb[0].mxu0
        %v472 = vpop.f32.mrb[0].mxu0
        %v473 = vadd.f32 0.0, %v472
        %v474 = vpop.f32.mrb[0].mxu0
        %475 = vmatprep.mubr.bf16.mxu0 0
        %476 = vmatmul.mubr.bf16.gmra.mrb[0].mxu0 %v314
        %v477 = vpop.f32.mrb[0].mxu0
        %v478 = vadd.f32 0.0, %v477
        %v479 = vpop.f32.mrb[0].mxu0
        %v480 = vpop.f32.mrb[0].mxu0
        %v481 = vadd.f32 0.0, %v480
        %v482 = vpop.f32.mrb[0].mxu0
        %483 = vmatprep.mubr.bf16.mxu0 0
        %484 = vmatmul.mubr.bf16.gmra.mrb[0].mxu0 %v315
        %v485 = vpop.f32.mrb[0].mxu0
        %v486 = vadd.f32 0.0, %v485
        %v487 = vpop.f32.mrb[0].mxu0
        %v488 = vpop.f32.mrb[0].mxu0
        %v489 = vadd.f32 0.0, %v488
        %v490 = vpop.f32.mrb[0].mxu0
        %491 = vmatprep.mubr.bf16.mxu0 0
        %492 = vmatmul.mubr.bf16.gmra.mrb[0].mxu0 %v316
        %v493 = vpop.f32.mrb[0].mxu0
        %v494 = vadd.f32 0.0, %v493
        %v495 = vpop.f32.mrb[0].mxu0
        %v496 = vpop.f32.mrb[0].mxu0
        %v497 = vadd.f32 0.0, %v496
        %v498 = vpop.f32.mrb[0].mxu0
        %499 = vmatprep.mubr.bf16.mxu0 0
        %500 = vmatmul.mubr.bf16.gmra.mrb[0].mxu0 %v317
        %v501 = vpop.f32.mrb[0].mxu0
        %v502 = vadd.f32 0.0, %v501
        %v503 = vpop.f32.mrb[0].mxu0
        %v504 = vpop.f32.mrb[0].mxu0
        %v505 = vadd.f32 0.0, %v504
        %v506 = vpop.f32.mrb[0].mxu0
        %507 = vmatprep.mubr.bf16.mxu0 0
        %508 = vmatmul.mubr.bf16.gmra.mrb[0].mxu0 %v318
        %v509 = vpop.f32.mrb[0].mxu0
        %v510 = vadd.f32 0.0, %v509
        %v511 = vpop.f32.mrb[0].mxu0
        %v512 = vpop.f32.mrb[0].mxu0
        %v513 = vadd.f32 0.0, %v512
        %v514 = vpop.f32.mrb[0].mxu0
        %515 = vmatprep.mubr.bf16.mxu0 0
        %516 = vmatmul.mubr.bf16.gmra.mrb[0].mxu0 %v319
        %v517 = vpop.f32.mrb[0].mxu0
        %v518 = vadd.f32 0.0, %v517
        %v519 = vpop.f32.mrb[0].mxu0
        %v520 = vpop.f32.mrb[0].mxu0
        %v521 = vadd.f32 0.0, %v520
        %v522 = vpop.f32.mrb[0].mxu0
        %523 = vmatprep.mubr.bf16.mxu0 0
        %524 = vmatmul.mubr.bf16.gmra.mrb[0].mxu0 %v320
        %v525 = vpop.f32.mrb[0].mxu0
        %v526 = vadd.f32 0.0, %v525
        %v527 = vpop.f32.mrb[0].mxu0
        %v528 = vpop.f32.mrb[0].mxu0
        %v529 = vadd.f32 0.0, %v528
        %v530 = vpop.f32.mrb[0].mxu0
        %531 = vmatprep.mubr.bf16.mxu0 0
        %532 = vmatmul.mubr.bf16.gmra.mrb[0].mxu0 %v321
        %v533 = vpop.f32.mrb[0].mxu0
        %v534 = vadd.f32 0.0, %v533
        %v535 = vpop.f32.mrb[0].mxu0
        %v536 = vpop.f32.mrb[0].mxu0
        %v537 = vadd.f32 0.0, %v536
        %v538 = vpop.f32.mrb[0].mxu0
        %539 = vmatprep.mubr.bf16.mxu0 0
        %540 = vmatmul.mubr.bf16.gmra.mrb[0].mxu0 %v322
        %v541 = vpop.f32.mrb[0].mxu0
        %v542 = vadd.f32 0.0, %v541
        %v543 = vpop.f32.mrb[0].mxu0
        %v544 = vpop.f32.mrb[0].mxu0
        %v545 = vadd.f32 0.0, %v544
        %v546 = vpop.f32.mrb[0].mxu0
        %547 = vdwg.mxu0
        %v548 = vadd.f32 %v422, %v425
        %v549 = vadd.f32 %v548, %v430
        %v550 = vadd.f32 %v549, %v433
        %v551 = vadd.f32 %v550, %v438
        %v552 = vadd.f32 %v551, %v441
        %v553 = vadd.f32 %v552, %v446
        %v554 = vadd.f32 %v553, %v449
        %v555 = vadd.f32 %v554, %v454
        %v556 = vadd.f32 %v555, %v457
        %v557 = vadd.f32 %v556, %v462
        %v558 = vadd.f32 %v557, %v465
        %v559 = vadd.f32 %v558, %v470
        %v560 = vadd.f32 %v559, %v473
        %v561 = vadd.f32 %v560, %v478
        %v562 = vadd.f32 %v561, %v481
        %v563 = vrot.slane %v562, 4
        %v564 = vadd.f32 %v562, %v563
        %v565 = vrot.slane %v564, 2
        %v566 = vadd.f32 %v564, %v565
        %v567 = vrot.slane %v566, 1
        %v568 = vadd.f32 %v566, %v567
        %v569 = vadd.f32 %v486, %v489
        %v570 = vadd.f32 %v569, %v494
        %v571 = vadd.f32 %v570, %v497
        %v572 = vadd.f32 %v571, %v502
        %v573 = vadd.f32 %v572, %v505
        %v574 = vadd.f32 %v573, %v510
        %v575 = vadd.f32 %v574, %v513
        %v576 = vadd.f32 %v575, %v518
        %v577 = vadd.f32 %v576, %v521
        %v578 = vadd.f32 %v577, %v526
        %v579 = vadd.f32 %v578, %v529
        %v580 = vadd.f32 %v579, %v534
        %v581 = vadd.f32 %v580, %v537
        %v582 = vadd.f32 %v581, %v542
        %v583 = vadd.f32 %v582, %v545
        %v584 = vrot.slane %v583, 4
        %v585 = vadd.f32 %v583, %v584
        %v586 = vrot.slane %v585, 2
        %v587 = vadd.f32 %v585, %v586
        %v588 = vrot.slane %v587, 1
        %v589 = vadd.f32 %v587, %v588
        %v590 = vrcp.pop 128.0
        %v591 = vmul.f32 %v568, %v590
        %v592 = vmul.f32 %v589, %v590
        %v593 = vmul.f32 %v422, %v422
        %v594 = vmul.f32 %v425, %v425
        %v595 = vmul.f32 %v430, %v430
        %v596 = vmul.f32 %v433, %v433
        %v597 = vmul.f32 %v438, %v438
        %v598 = vmul.f32 %v441, %v441
        %v599 = vmul.f32 %v446, %v446
        %v600 = vmul.f32 %v449, %v449
        %v601 = vmul.f32 %v454, %v454
        %v602 = vmul.f32 %v457, %v457
        %v603 = vmul.f32 %v462, %v462
        %v604 = vmul.f32 %v465, %v465
        %v605 = vmul.f32 %v470, %v470
        %v606 = vmul.f32 %v473, %v473
        %v607 = vmul.f32 %v478, %v478
        %v608 = vmul.f32 %v481, %v481
        %v609 = vmul.f32 %v486, %v486
        %v610 = vmul.f32 %v489, %v489
        %v611 = vmul.f32 %v494, %v494
        %v612 = vmul.f32 %v497, %v497
        %v613 = vmul.f32 %v502, %v502
        %v614 = vmul.f32 %v505, %v505
        %v615 = vmul.f32 %v510, %v510
        %v616 = vmul.f32 %v513, %v513
        %v617 = vmul.f32 %v518, %v518
        %v618 = vmul.f32 %v521, %v521
        %v619 = vmul.f32 %v526, %v526
        %v620 = vmul.f32 %v529, %v529
        %v621 = vmul.f32 %v534, %v534
        %v622 = vmul.f32 %v537, %v537
        %v623 = vmul.f32 %v542, %v542
        %v624 = vmul.f32 %v545, %v545
        %v625 = vadd.f32 %v593, %v594
        %v626 = vadd.f32 %v625, %v595
        %v627 = vadd.f32 %v626, %v596
        %v628 = vadd.f32 %v627, %v597
        %v629 = vadd.f32 %v628, %v598
        %v630 = vadd.f32 %v629, %v599
        %v631 = vadd.f32 %v630, %v600
        %v632 = vadd.f32 %v631, %v601
        %v633 = vadd.f32 %v632, %v602
        %v634 = vadd.f32 %v633, %v603
        %v635 = vadd.f32 %v634, %v604
        %v636 = vadd.f32 %v635, %v605
        %v637 = vadd.f32 %v636, %v606
        %v638 = vadd.f32 %v637, %v607
        %v639 = vadd.f32 %v638, %v608
        %v640 = vrot.slane %v639, 4
        %v641 = vadd.f32 %v639, %v640
        %v642 = vrot.slane %v641, 2
        %v643 = vadd.f32 %v641, %v642
        %v644 = vrot.slane %v643, 1
        %v645 = vadd.f32 %v643, %v644
        %v646 = vadd.f32 %v609, %v610
        %v647 = vadd.f32 %v646, %v611
        %v648 = vadd.f32 %v647, %v612
        %v649 = vadd.f32 %v648, %v613
        %v650 = vadd.f32 %v649, %v614
        %v651 = vadd.f32 %v650, %v615
        %v652 = vadd.f32 %v651, %v616
        %v653 = vadd.f32 %v652, %v617
        %v654 = vadd.f32 %v653, %v618
        %v655 = vadd.f32 %v654, %v619
        %v656 = vadd.f32 %v655, %v620
        %v657 = vadd.f32 %v656, %v621
        %v658 = vadd.f32 %v657, %v622
        %v659 = vadd.f32 %v658, %v623
        %v660 = vadd.f32 %v659, %v624
        %v661 = vrot.slane %v660, 4
        %v662 = vadd.f32 %v660, %v661
        %v663 = vrot.slane %v662, 2
        %v664 = vadd.f32 %v662, %v663
        %v665 = vrot.slane %v664, 1
        %v666 = vadd.f32 %v664, %v665
        %v667 = vmul.f32 %v645, %v590
        %v668 = vmul.f32 %v666, %v590
        %v669 = vmul.f32 %v591, %v591
        %v670 = vmul.f32 %v592, %v592
        %v671 = vsub.f32 %v667, %v669
        %v672 = vsub.f32 %v668, %v670
        %v673 = vmax.f32 %v671, 0.0
        %v674 = vmax.f32 %v672, 0.0
        %v675 = vadd.f32 %v673, 1e-05
        %v676 = vadd.f32 %v674, 1e-05
        %v677 = vrsqrt.pop %v675
        %v678 = vrsqrt.pop %v676
        %v679 = vld [vmem:[%s2] sm:$0x1]
        %v680 = vmul.f32 %v679, %v677
        %v681 = vmul.f32 %v679, %v678
        %v682 = vld [vmem:[%s3] sm:$0x1]
        %v683 = vmul.f32 %v591, %v680
        %v684 = vmul.f32 %v592, %v681
        %v685 = vsub.f32 %v682, %v683
        %v686 = vsub.f32 %v682, %v684
        %v689 = vlaneseq
        %v690 = vshrl.u32 %v689, 7
        %v691 = vsub.s32 0, %v690
        %v692 = vrot.slane %v680, %v691
        %v693 = vlaneseq
        %v694 = vshrl.u32 %v693, 7
        %v695 = vsub.s32 0, %v694
        %v696 = vrot.slane %v681, %v695
        %v699 = vmul.f32 %v422, %v692
        %v700 = vmul.f32 %v425, %v692
        %v701 = vmul.f32 %v430, %v692
        %v702 = vmul.f32 %v433, %v692
        %v703 = vmul.f32 %v438, %v692
        %v704 = vmul.f32 %v441, %v692
        %v705 = vmul.f32 %v446, %v692
        %v706 = vmul.f32 %v449, %v692
        %v707 = vmul.f32 %v454, %v692
        %v708 = vmul.f32 %v457, %v692
        %v709 = vmul.f32 %v462, %v692
        %v710 = vmul.f32 %v465, %v692
        %v711 = vmul.f32 %v470, %v692
        %v712 = vmul.f32 %v473, %v692
        %v713 = vmul.f32 %v478, %v692
        %v714 = vmul.f32 %v481, %v692
        %v715 = vmul.f32 %v486, %v696
        %v716 = vmul.f32 %v489, %v696
        %v717 = vmul.f32 %v494, %v696
        %v718 = vmul.f32 %v497, %v696
        %v719 = vmul.f32 %v502, %v696
        %v720 = vmul.f32 %v505, %v696
        %v721 = vmul.f32 %v510, %v696
        %v722 = vmul.f32 %v513, %v696
        %v723 = vmul.f32 %v518, %v696
        %v724 = vmul.f32 %v521, %v696
        %v725 = vmul.f32 %v526, %v696
        %v726 = vmul.f32 %v529, %v696
        %v727 = vmul.f32 %v534, %v696
        %v728 = vmul.f32 %v537, %v696
        %v729 = vmul.f32 %v542, %v696
        %v730 = vmul.f32 %v545, %v696
        %v733 = vlaneseq
        %v734 = vshrl.u32 %v733, 7
        %v735 = vsub.s32 0, %v734
        %v736 = vrot.slane %v685, %v735
        %v737 = vlaneseq
        %v738 = vshrl.u32 %v737, 7
        %v739 = vsub.s32 0, %v738
        %v740 = vrot.slane %v686, %v739
        %v743 = vadd.f32 %v699, %v736
        %v744 = vadd.f32 %v700, %v736
        %v745 = vadd.f32 %v701, %v736
        %v746 = vadd.f32 %v702, %v736
        %v747 = vadd.f32 %v703, %v736
        %v748 = vadd.f32 %v704, %v736
        %v749 = vadd.f32 %v705, %v736
        %v750 = vadd.f32 %v706, %v736
        %v751 = vadd.f32 %v707, %v736
        %v752 = vadd.f32 %v708, %v736
        %v753 = vadd.f32 %v709, %v736
        %v754 = vadd.f32 %v710, %v736
        %v755 = vadd.f32 %v711, %v736
        %v756 = vadd.f32 %v712, %v736
        %v757 = vadd.f32 %v713, %v736
        %v758 = vadd.f32 %v714, %v736
        %v759 = vadd.f32 %v715, %v740
        %v760 = vadd.f32 %v716, %v740
        %v761 = vadd.f32 %v717, %v740
        %v762 = vadd.f32 %v718, %v740
        %v763 = vadd.f32 %v719, %v740
        %v764 = vadd.f32 %v720, %v740
        %v765 = vadd.f32 %v721, %v740
        %v766 = vadd.f32 %v722, %v740
        %v767 = vadd.f32 %v723, %v740
        %v768 = vadd.f32 %v724, %v740
        %v769 = vadd.f32 %v725, %v740
        %v770 = vadd.f32 %v726, %v740
        %v771 = vadd.f32 %v727, %v740
        %v772 = vadd.f32 %v728, %v740
        %v773 = vadd.f32 %v729, %v740
        %v774 = vadd.f32 %v730, %v740
        %v775 = vmax.f32 %v743, 0.0
        %v776 = vmax.f32 %v744, 0.0
        %v777 = vmax.f32 %v745, 0.0
        %v778 = vmax.f32 %v746, 0.0
        %v779 = vmax.f32 %v747, 0.0
        %v780 = vmax.f32 %v748, 0.0
        %v781 = vmax.f32 %v749, 0.0
        %v782 = vmax.f32 %v750, 0.0
        %v783 = vmax.f32 %v751, 0.0
        %v784 = vmax.f32 %v752, 0.0
        %v785 = vmax.f32 %v753, 0.0
        %v786 = vmax.f32 %v754, 0.0
        %v787 = vmax.f32 %v755, 0.0
        %v788 = vmax.f32 %v756, 0.0
        %v789 = vmax.f32 %v757, 0.0
        %v790 = vmax.f32 %v758, 0.0
        %v791 = vmax.f32 %v759, 0.0
        %v792 = vmax.f32 %v760, 0.0
        %v793 = vmax.f32 %v761, 0.0
        %v794 = vmax.f32 %v762, 0.0
        %v795 = vmax.f32 %v763, 0.0
        %v796 = vmax.f32 %v764, 0.0
        %v797 = vmax.f32 %v765, 0.0
        %v798 = vmax.f32 %v766, 0.0
        %v799 = vmax.f32 %v767, 0.0
        %v800 = vmax.f32 %v768, 0.0
        %v801 = vmax.f32 %v769, 0.0
        %v802 = vmax.f32 %v770, 0.0
        %v803 = vmax.f32 %v771, 0.0
        %v804 = vmax.f32 %v772, 0.0
        %v805 = vmax.f32 %v773, 0.0
        %v806 = vmax.f32 %v774, 0.0
        %v807 = vpack.c.bf16 %v776, %v775
        %v808 = vpack.c.bf16 %v778, %v777
        %v809 = vpack.c.bf16 %v780, %v779
        %v810 = vpack.c.bf16 %v782, %v781
        %v811 = vpack.c.bf16 %v784, %v783
        %v812 = vpack.c.bf16 %v786, %v785
        %v813 = vpack.c.bf16 %v788, %v787
        %v814 = vpack.c.bf16 %v790, %v789
        %v815 = vpack.c.bf16 %v792, %v791
        %v816 = vpack.c.bf16 %v794, %v793
        %v817 = vpack.c.bf16 %v796, %v795
        %v818 = vpack.c.bf16 %v798, %v797
        %v819 = vpack.c.bf16 %v800, %v799
        %v820 = vpack.c.bf16 %v802, %v801
        %v821 = vpack.c.bf16 %v804, %v803
        %v822 = vpack.c.bf16 %v806, %v805
        %v823 = vld [vmem:[#allocation7] sm:$0xf]
        %v824 = vld [vmem:[#allocation7 + $0x4] sm:$0xf]
        %v825 = vld [vmem:[#allocation7 + $0x8] sm:$0xf]
        %v826 = vld [vmem:[#allocation7 + $0xc] sm:$0xf]
        %v827 = vld [vmem:[#allocation7 + $0x10] sm:$0xf]
        %v828 = vld [vmem:[#allocation7 + $0x14] sm:$0xf]
        %v829 = vld [vmem:[#allocation7 + $0x18] sm:$0xf]
        %v830 = vld [vmem:[#allocation7 + $0x1c] sm:$0xf]
        %v831 = vld [vmem:[#allocation7 + $0x20] sm:$0xf]
        %v832 = vld [vmem:[#allocation7 + $0x24] sm:$0xf]
        %v833 = vld [vmem:[#allocation7 + $0x28] sm:$0xf]
        %v834 = vld [vmem:[#allocation7 + $0x2c] sm:$0xf]
        %v835 = vld [vmem:[#allocation7 + $0x30] sm:$0xf]
        %v836 = vld [vmem:[#allocation7 + $0x34] sm:$0xf]
        %v837 = vld [vmem:[#allocation7 + $0x38] sm:$0xf]
        %v838 = vld [vmem:[#allocation7 + $0x3c] sm:$0xf]
        %v855 = vunpack.c.l.b16 %v823
        %v856 = vunpack.c.l.b16 %v824
        %v857 = vunpack.c.l.b16 %v825
        %v858 = vunpack.c.l.b16 %v826
        %v859 = vunpack.c.l.b16 %v827
        %v860 = vunpack.c.l.b16 %v828
        %v861 = vunpack.c.l.b16 %v829
        %v862 = vunpack.c.l.b16 %v830
        %v863 = vunpack.c.l.b16 %v831
        %v864 = vunpack.c.l.b16 %v832
        %v865 = vunpack.c.l.b16 %v833
        %v866 = vunpack.c.l.b16 %v834
        %v867 = vunpack.c.l.b16 %v835
        %v868 = vunpack.c.l.b16 %v836
        %v869 = vunpack.c.l.b16 %v837
        %v870 = vunpack.c.l.b16 %v838
        %v871 = vpack.c.b16 %v856, %v855
        %v872 = vpack.c.b16 %v858, %v857
        %v873 = vpack.c.b16 %v860, %v859
        %v874 = vpack.c.b16 %v862, %v861
        %v875 = vpack.c.b16 %v864, %v863
        %v876 = vpack.c.b16 %v866, %v865
        %v877 = vpack.c.b16 %v868, %v867
        %v878 = vpack.c.b16 %v870, %v869
        %887 = vmatprep.subr.bf16.mxu0 0
        %888 = vmatpush1.bf16.msra.mxu0 %v871
        %889 = vmatprep.subr.bf16.mxu0 0
        %890 = vmatpush1.bf16.msra.mxu0 %v872
        %891 = vmatprep.subr.bf16.mxu0 0
        %892 = vmatpush1.bf16.msra.mxu0 %v873
        %893 = vmatprep.subr.bf16.mxu0 0
        %894 = vmatpush1.bf16.msra.mxu0 %v874
        %895 = vmatprep.subr.bf16.mxu0 0
        %896 = vmatpush1.bf16.msra.mxu0 %v875
        %897 = vmatprep.subr.bf16.mxu0 0
        %898 = vmatpush1.bf16.msra.mxu0 %v876
        %899 = vmatprep.subr.bf16.mxu0 0
        %900 = vmatpush1.bf16.msra.mxu0 %v877
        %901 = vmatprep.subr.bf16.mxu0 0
        %902 = vmatpush1.bf16.msra.mxu0 %v878
        %903 = vmatprep.subr.bf16.mxu0 0
        %904 = vmatpush1.bf16.msra.mxu0 0
        %905 = vmatprep.subr.bf16.mxu0 0
        %906 = vmatpush1.bf16.msra.mxu0 0
        %907 = vmatprep.subr.bf16.mxu0 0
        %908 = vmatpush1.bf16.msra.mxu0 0
        %909 = vmatprep.subr.bf16.mxu0 0
        %910 = vmatpush1.bf16.msra.mxu0 0
        %911 = vmatprep.subr.bf16.mxu0 0
        %912 = vmatpush1.bf16.msra.mxu0 0
        %913 = vmatprep.subr.bf16.mxu0 0
        %914 = vmatpush1.bf16.msra.mxu0 0
        %915 = vmatprep.subr.bf16.mxu0 0
        %916 = vmatpush1.bf16.msra.mxu0 0
        %917 = vmatprep.subr.bf16.mxu0 0
        %918 = vmatpush1.bf16.msra.mxu0 0
        %919 = vmatprep.mubr.bf16.mxu0 0
        %920 = vmatmul.mubr.bf16.gmra.mrb[0].mxu0 %v807
        %v921 = vpop.f32.mrb[0].mxu0
        %v922 = vadd.f32 0.0, %v921
        %v923 = vpop.f32.mrb[0].mxu0
        %v924 = vpop.f32.mrb[0].mxu0
        %v925 = vadd.f32 0.0, %v924
        %v926 = vpop.f32.mrb[0].mxu0
        %927 = vmatprep.mubr.bf16.mxu0 0
        %928 = vmatmul.mubr.bf16.gmra.mrb[0].mxu0 %v808
        %v929 = vpop.f32.mrb[0].mxu0
        %v930 = vadd.f32 0.0, %v929
        %v931 = vpop.f32.mrb[0].mxu0
        %v932 = vpop.f32.mrb[0].mxu0
        %v933 = vadd.f32 0.0, %v932
        %v934 = vpop.f32.mrb[0].mxu0
        %935 = vmatprep.mubr.bf16.mxu0 0
        %936 = vmatmul.mubr.bf16.gmra.mrb[0].mxu0 %v809
        %v937 = vpop.f32.mrb[0].mxu0
        %v938 = vadd.f32 0.0, %v937
        %v939 = vpop.f32.mrb[0].mxu0
        %v940 = vpop.f32.mrb[0].mxu0
        %v941 = vadd.f32 0.0, %v940
        %v942 = vpop.f32.mrb[0].mxu0
        %943 = vmatprep.mubr.bf16.mxu0 0
        %944 = vmatmul.mubr.bf16.gmra.mrb[0].mxu0 %v810
        %v945 = vpop.f32.mrb[0].mxu0
        %v946 = vadd.f32 0.0, %v945
        %v947 = vpop.f32.mrb[0].mxu0
        %v948 = vpop.f32.mrb[0].mxu0
        %v949 = vadd.f32 0.0, %v948
        %v950 = vpop.f32.mrb[0].mxu0
        %951 = vmatprep.mubr.bf16.mxu0 0
        %952 = vmatmul.mubr.bf16.gmra.mrb[0].mxu0 %v811
        %v953 = vpop.f32.mrb[0].mxu0
        %v954 = vadd.f32 0.0, %v953
        %v955 = vpop.f32.mrb[0].mxu0
        %v956 = vpop.f32.mrb[0].mxu0
        %v957 = vadd.f32 0.0, %v956
        %v958 = vpop.f32.mrb[0].mxu0
        %959 = vmatprep.mubr.bf16.mxu0 0
        %960 = vmatmul.mubr.bf16.gmra.mrb[0].mxu0 %v812
        %v961 = vpop.f32.mrb[0].mxu0
        %v962 = vadd.f32 0.0, %v961
        %v963 = vpop.f32.mrb[0].mxu0
        %v964 = vpop.f32.mrb[0].mxu0
        %v965 = vadd.f32 0.0, %v964
        %v966 = vpop.f32.mrb[0].mxu0
        %967 = vmatprep.mubr.bf16.mxu0 0
        %968 = vmatmul.mubr.bf16.gmra.mrb[0].mxu0 %v813
        %v969 = vpop.f32.mrb[0].mxu0
        %v970 = vadd.f32 0.0, %v969
        %v971 = vpop.f32.mrb[0].mxu0
        %v972 = vpop.f32.mrb[0].mxu0
        %v973 = vadd.f32 0.0, %v972
        %v974 = vpop.f32.mrb[0].mxu0
        %975 = vmatprep.mubr.bf16.mxu0 0
        %976 = vmatmul.mubr.bf16.gmra.mrb[0].mxu0 %v814
        %v977 = vpop.f32.mrb[0].mxu0
        %v978 = vadd.f32 0.0, %v977
        %v979 = vpop.f32.mrb[0].mxu0
        %v980 = vpop.f32.mrb[0].mxu0
        %v981 = vadd.f32 0.0, %v980
        %v982 = vpop.f32.mrb[0].mxu0
        %983 = vmatprep.mubr.bf16.mxu0 0
        %984 = vmatmul.mubr.bf16.gmra.mrb[0].mxu0 %v815
        %v985 = vpop.f32.mrb[0].mxu0
        %v986 = vadd.f32 0.0, %v985
        %v987 = vpop.f32.mrb[0].mxu0
        %v988 = vpop.f32.mrb[0].mxu0
        %v989 = vadd.f32 0.0, %v988
        %v990 = vpop.f32.mrb[0].mxu0
        %991 = vmatprep.mubr.bf16.mxu0 0
        %992 = vmatmul.mubr.bf16.gmra.mrb[0].mxu0 %v816
        %v993 = vpop.f32.mrb[0].mxu0
        %v994 = vadd.f32 0.0, %v993
        %v995 = vpop.f32.mrb[0].mxu0
        %v996 = vpop.f32.mrb[0].mxu0
        %v997 = vadd.f32 0.0, %v996
        %v998 = vpop.f32.mrb[0].mxu0
        %999 = vmatprep.mubr.bf16.mxu0 0
        %1000 = vmatmul.mubr.bf16.gmra.mrb[0].mxu0 %v817
        %v1001 = vpop.f32.mrb[0].mxu0
        %v1002 = vadd.f32 0.0, %v1001
        %v1003 = vpop.f32.mrb[0].mxu0
        %v1004 = vpop.f32.mrb[0].mxu0
        %v1005 = vadd.f32 0.0, %v1004
        %v1006 = vpop.f32.mrb[0].mxu0
        %1007 = vmatprep.mubr.bf16.mxu0 0
        %1008 = vmatmul.mubr.bf16.gmra.mrb[0].mxu0 %v818
        %v1009 = vpop.f32.mrb[0].mxu0
        %v1010 = vadd.f32 0.0, %v1009
        %v1011 = vpop.f32.mrb[0].mxu0
        %v1012 = vpop.f32.mrb[0].mxu0
        %v1013 = vadd.f32 0.0, %v1012
        %v1014 = vpop.f32.mrb[0].mxu0
        %1015 = vmatprep.mubr.bf16.mxu0 0
        %1016 = vmatmul.mubr.bf16.gmra.mrb[0].mxu0 %v819
        %v1017 = vpop.f32.mrb[0].mxu0
        %v1018 = vadd.f32 0.0, %v1017
        %v1019 = vpop.f32.mrb[0].mxu0
        %v1020 = vpop.f32.mrb[0].mxu0
        %v1021 = vadd.f32 0.0, %v1020
        %v1022 = vpop.f32.mrb[0].mxu0
        %1023 = vmatprep.mubr.bf16.mxu0 0
        %1024 = vmatmul.mubr.bf16.gmra.mrb[0].mxu0 %v820
        %v1025 = vpop.f32.mrb[0].mxu0
        %v1026 = vadd.f32 0.0, %v1025
        %v1027 = vpop.f32.mrb[0].mxu0
        %v1028 = vpop.f32.mrb[0].mxu0
        %v1029 = vadd.f32 0.0, %v1028
        %v1030 = vpop.f32.mrb[0].mxu0
        %1031 = vmatprep.mubr.bf16.mxu0 0
        %1032 = vmatmul.mubr.bf16.gmra.mrb[0].mxu0 %v821
        %v1033 = vpop.f32.mrb[0].mxu0
        %v1034 = vadd.f32 0.0, %v1033
        %v1035 = vpop.f32.mrb[0].mxu0
        %v1036 = vpop.f32.mrb[0].mxu0
        %v1037 = vadd.f32 0.0, %v1036
        %v1038 = vpop.f32.mrb[0].mxu0
        %1039 = vmatprep.mubr.bf16.mxu0 0
        %1040 = vmatmul.mubr.bf16.gmra.mrb[0].mxu0 %v822
        %v1041 = vpop.f32.mrb[0].mxu0
        %v1042 = vadd.f32 0.0, %v1041
        %v1043 = vpop.f32.mrb[0].mxu0
        %v1044 = vpop.f32.mrb[0].mxu0
        %v1045 = vadd.f32 0.0, %v1044
        %v1046 = vpop.f32.mrb[0].mxu0
        %1047 = vdwg.mxu0
        %1048 = vst [vmem:[%s271] sm:$0xff] %v922
        %1049 = vst [vmem:[%s271 + $0x8] sm:$0xff] %v925
        %1050 = vst [vmem:[%s271 + $0x10] sm:$0xff] %v930
        %1051 = vst [vmem:[%s271 + $0x18] sm:$0xff] %v933
        %1052 = vst [vmem:[%s271 + $0x20] sm:$0xff] %v938
        %1053 = vst [vmem:[%s271 + $0x28] sm:$0xff] %v941
        %1054 = vst [vmem:[%s271 + $0x30] sm:$0xff] %v946
        %1055 = vst [vmem:[%s271 + $0x38] sm:$0xff] %v949
        %1056 = vst [vmem:[%s271 + $0x40] sm:$0xff] %v954
        %1057 = vst [vmem:[%s271 + $0x48] sm:$0xff] %v957
        %1058 = vst [vmem:[%s271 + $0x50] sm:$0xff] %v962
        %1059 = vst [vmem:[%s271 + $0x58] sm:$0xff] %v965
        %1060 = vst [vmem:[%s271 + $0x60] sm:$0xff] %v970
        %1061 = vst [vmem:[%s271 + $0x68] sm:$0xff] %v973
        %1062 = vst [vmem:[%s271 + $0x70] sm:$0xff] %v978
        %1063 = vst [vmem:[%s271 + $0x78] sm:$0xff] %v981
        %1064 = vst [vmem:[%s271 + $0x80] sm:$0xff] %v986
        %1065 = vst [vmem:[%s271 + $0x88] sm:$0xff] %v989
        %1066 = vst [vmem:[%s271 + $0x90] sm:$0xff] %v994
        %1067 = vst [vmem:[%s271 + $0x98] sm:$0xff] %v997
        %1068 = vst [vmem:[%s271 + $0xa0] sm:$0xff] %v1002
        %1069 = vst [vmem:[%s271 + $0xa8] sm:$0xff] %v1005
        %1070 = vst [vmem:[%s271 + $0xb0] sm:$0xff] %v1010
        %1071 = vst [vmem:[%s271 + $0xb8] sm:$0xff] %v1013
        %1072 = vst [vmem:[%s271 + $0xc0] sm:$0xff] %v1018
        %1073 = vst [vmem:[%s271 + $0xc8] sm:$0xff] %v1021
        %1074 = vst [vmem:[%s271 + $0xd0] sm:$0xff] %v1026
        %1075 = vst [vmem:[%s271 + $0xd8] sm:$0xff] %v1029
        %1076 = vst [vmem:[%s271 + $0xe0] sm:$0xff] %v1034
        %1077 = vst [vmem:[%s271 + $0xe8] sm:$0xff] %v1037
        %1078 = vst [vmem:[%s271 + $0xf0] sm:$0xff] %v1042
        %1079 = vst [vmem:[%s271 + $0xf8] sm:$0xff] %v1045
        %s1080 = sand.u32 %s141, 1
        %s1081 = scalar_lea.sflag [#allocation4], %s1080
        %s1082 = sand.u32 %s141, 1
        %s1083 = smul.addr %s1082, 256
        %s1084 = scalar_lea.vmem [#allocation8], %s1083
        // Predicated region
        $region53: #{tpu_custom_call.1} parent=39 // pred_check
          %p1085 = pneg %p151
        $region54: #{tpu_custom_call.1} parent=39 // pred_check_branch
          %1087 = sbr.rel (%p1085) target = $region56
        $region55: #{tpu_custom_call.1} parent=39 // pred_region
          %s1088 = smul.u32 32, %s23
          %s1090 = ssub.s32 4096, 4096
          %1091 = vsyncadd %s1081, %s1090
          %s1092 = smul.addr %s1088, 128
          %s1093 = scalar_lea.hbm %s5, %s1092
          %s1094 = sshll.u32 %s1084, 4
          %s1095 = int_to_ptr.vmem [resolvable:$true] %s1094
          %1100 = dma.vmem_to_hbm [thread:$0]  %s1095, 4096, %s1093, %s1081, 128, 128, 8
        $region56: #{tpu_custom_call.1} parent=39 // pred_fallthru
          _
      $region40: #{tpu_custom_call.1} parent=5 // pred_fallthru
        _
      %p1101 = scmp.le.s32.totalorder 2, %s18
      // Predicated region
      $region57: #{tpu_custom_call.1} parent=5 // pred_check
        %p1102 = pneg %p1101
      $region58: #{tpu_custom_call.1} parent=5 // pred_check_branch
        %1104 = sbr.rel (%p1102) target = $region60
      $region59: #{tpu_custom_call.1} parent=5 // pred_region
        %s1105 = ssub.s32 %s18, 2
        // Predicated region
        $region61: #{tpu_custom_call.1} parent=59 // pred_check
          %p1106 = pneg %p157
        $region62: #{tpu_custom_call.1} parent=59 // pred_check_branch
          %1108 = sbr.rel (%p1106) target = $region64
        $region63: #{tpu_custom_call.1} parent=59 // pred_region
          %s1109 = sand.u32 %s142, 1
          %s1110 = scalar_lea.sflag [#allocation4], %s1109
          %s1111 = sand.u32 %s142, 1
          %s1112 = smul.addr %s1111, 256
          %s1113 = scalar_lea.vmem [#allocation8], %s1112
          %1114 = dma.done %s1110, 4096
        $region64: #{tpu_custom_call.1} parent=59 // pred_fallthru
          _
      $region60: #{tpu_custom_call.1} parent=5 // pred_fallthru
        _
    $region6: #{tpu_custom_call.1} parent=1 // loop_footer
      %s22 = sadd.s32 1, %s18
    $region7: #{tpu_custom_call.1} parent=1 // loop_footer_branch
      %17 = sbr.rel target = $region3
    $region8: #{tpu_custom_call.1} parent=1 // loop_exit
      _
    %1115 = vsyncpa [#allocation3], 1
    %s1116 = scalar_lea.sflag [#allocation3], 1
    %1117 = vsyncpa %s1116, 1
    %1118 = vsyncpa [#allocation6], 1
    %1119 = vsyncpa [#allocation4], 1
    %s1120 = scalar_lea.sflag [#allocation4], 1
    %1121 = vsyncpa %s1120, 1

</llo_original>
